<compile_context>
chip_gen: v5e
topology: v5e:2x2
jax: 0.10.0
libtpu: 0.0.40
codegen_flags: <defaults>
</compile_context>

<pallas_src>
import functools
import math

import jax
import jax.numpy as jnp
from jax.experimental import pallas as pl
from jax.experimental.pallas import tpu as pltpu


def _log_mse_kernel(p_ref, q_ref, o_ref, *, eps):
    # One (tile_rows, W) block per grid step; the full last dim is present so the
    # row-wise min is local to the block.
    p = p_ref[...].astype(jnp.float32)
    q = q_ref[...].astype(jnp.float32)

    minq = jnp.min(q, axis=-1, keepdims=True)        # cross-lane reduce (XLU)
    q_log = jnp.log(q - minq + eps)                  # transcendental (EUP slot)
    diff = p - q_log
    o_ref[...] = (diff * diff).astype(o_ref.dtype)   # reduction='none' -> elementwise


def _pick_row_tile(rows, w, bytes_per_elem, budget_bytes=8 * 1024 * 1024):
    """Largest power-of-two row tile that divides `rows` and keeps
    (2 inputs + 1 output) x double-buffering comfortably inside scoped VMEM."""
    max_rows = max(8, budget_bytes // max(1, w * bytes_per_elem * 6))
    for cand in (2048, 1024, 512, 256, 128, 64, 32, 16, 8):
        if cand <= max_rows and rows % cand == 0:
            return cand
    return rows  # fall back to a single full-array block (always legal)


def log_mse_loss(p: jax.Array, q: jax.Array, eps: float = 1.0) -> jax.Array:
    """Pallas equivalent of LogMSELoss(reduction='none', eps=eps).forward(p, q)."""
    assert p.shape == q.shape, "p and q must have the same shape"

    w = p.shape[-1]
    rows = math.prod(p.shape[:-1]) if p.ndim > 1 else 1
    p2 = p.reshape(rows, w)   # last dim stays contiguous -> lane axis
    q2 = q.reshape(rows, w)

    out_dtype = jnp.result_type(p.dtype, q.dtype)
    bytes_per_elem = max(jnp.dtype(p.dtype).itemsize,
                         jnp.dtype(q.dtype).itemsize,
                         jnp.dtype(out_dtype).itemsize)
    tr = _pick_row_tile(rows, w, bytes_per_elem)
    grid = (rows // tr,)

    out2d = pl.pallas_call(
        functools.partial(_log_mse_kernel, eps=float(eps)),
        out_shape=jax.ShapeDtypeStruct((rows, w), out_dtype),
        grid=grid,
        in_specs=[
            pl.BlockSpec((tr, w), lambda i: (i, 0)),
            pl.BlockSpec((tr, w), lambda i: (i, 0)),
        ],
        out_specs=pl.BlockSpec((tr, w), lambda i: (i, 0)),
        compiler_params=pltpu.CompilerParams(
            dimension_semantics=("parallel",),
        ),
    )(p2, q2)

    return out2d.reshape(p.shape)


if __name__ == "__main__":
    key = jax.random.PRNGKey(0)
    k1, k2 = jax.random.split(key)
    # Small NCHW-style (prediction, target) pair.
    p = jax.random.normal(k1, (2, 4, 16, 16), dtype=jnp.float32)
    q = jax.random.normal(k2, (2, 4, 16, 16), dtype=jnp.float32)

    out = log_mse_loss(p, q, eps=1.0)
    out = jax.block_until_ready(out)

    # Pure-JAX reference of the PyTorch forward (log_prediction=False path).
    minq = jnp.min(q, axis=-1, keepdims=True)
    q_ref = jnp.log(q - minq + 1.0)
    ref = (p - q_ref) ** 2

    assert out.shape == p.shape
    assert out.dtype == ref.dtype
    assert jnp.allclose(out, ref, atol=1e-5, rtol=1e-5)
    print("KERNEL_OK")
</pallas_src>

<mosaic_0001>
module attributes {stable_mosaic.version = 11 : i64} {
  func.func @_log_mse_kernel(%arg0: i32, %arg1: memref<128x16xf32, #tpu.memory_space<vmem>>, %arg2: memref<128x16xf32, #tpu.memory_space<vmem>>, %arg3: memref<128x16xf32, #tpu.memory_space<vmem>>) attributes {dimension_semantics = [#tpu.dimension_semantics<parallel>], iteration_bounds = array<i64: 1>, scalar_prefetch = 0 : i64, scratch_operands = 0 : i64, tpu.core_type = #tpu.core_type<tc>, window_params = [{transform_indices = @transform_0, window_bounds = array<i64: 128, 16>}, {transform_indices = @transform_1, window_bounds = array<i64: 128, 16>}, {transform_indices = @transform_2, window_bounds = array<i64: 128, 16>}]} {
    %c0 = arith.constant 0 : index
    %c0_0 = arith.constant 0 : index
    %0 = vector.load %arg1[%c0, %c0_0] : memref<128x16xf32, #tpu.memory_space<vmem>>, vector<128x16xf32>
    %c0_1 = arith.constant 0 : index
    %c0_2 = arith.constant 0 : index
    %1 = vector.load %arg2[%c0_1, %c0_2] : memref<128x16xf32, #tpu.memory_space<vmem>>, vector<128x16xf32>
    %cst = arith.constant dense<0x7F800000> : vector<128xf32>
    %2 = vector.multi_reduction <minimumf>, %1, %cst [1] : vector<128x16xf32> to vector<128xf32>
    %3 = vector.shape_cast %2 : vector<128xf32> to vector<128x1xf32>
    %4 = vector.broadcast %3 : vector<128x1xf32> to vector<128x16xf32>
    %5 = arith.subf %1, %4 : vector<128x16xf32>
    %cst_3 = arith.constant 1.000000e+00 : f32
    %6 = vector.broadcast %cst_3 : f32 to vector<128x16xf32>
    %7 = arith.addf %5, %6 : vector<128x16xf32>
    %8 = math.log %7 : vector<128x16xf32>
    %9 = arith.subf %0, %8 : vector<128x16xf32>
    %10 = arith.mulf %9, %9 : vector<128x16xf32>
    %c0_4 = arith.constant 0 : index
    %c0_5 = arith.constant 0 : index
    %11 = vector.load %arg3[%c0_4, %c0_5] : memref<128x16xf32, #tpu.memory_space<vmem>>, vector<128x16xf32>
    tpu.vector_store %arg3[%c0_4, %c0_5], %10 {strides = array<i32>} : memref<128x16xf32, #tpu.memory_space<vmem>>, vector<128x16xf32>,
    return
  }
  func.func @transform_0(%arg0: i32) -> (i32, i32) {
    %c0_i32 = arith.constant 0 : i32
    %c0_i32_0 = arith.constant 0 : i32
    return %arg0, %c0_i32 : i32, i32
  }
  func.func @transform_1(%arg0: i32) -> (i32, i32) {
    %c0_i32 = arith.constant 0 : i32
    %c0_i32_0 = arith.constant 0 : i32
    return %arg0, %c0_i32 : i32, i32
  }
  func.func @transform_2(%arg0: i32) -> (i32, i32) {
    %c0_i32 = arith.constant 0 : i32
    %c0_i32_0 = arith.constant 0 : i32
    return %arg0, %c0_i32 : i32, i32
  }
}

</mosaic_0001>

<llo_original>
// kernel: tpu_custom_call.1
$region0: #{tpu_custom_call.1}
  #allocation0 [shape = 'u32[]', space=smem, size = 0x4, offset = 0x4, fixed_abs, tag = 'smem constant byte address 0x4 - core index']
  #allocation1 [shape = 'u32[72,128]{1,0:T(1,128)}', space=vmem, size = 0x9000, scoped, tag = 'internal scratch']
  %s0 = inlined_call_operand.vmem [shape: f32[128,16], index: 0, kind: input, shape index: {}]
  %s1 = inlined_call_operand.vmem [shape: f32[128,16], index: 1, kind: input, shape index: {}]
  %s2 = inlined_call_operand.vmem [shape: f32[128,16], index: 2, kind: output, shape index: {}]
  %s3 = sld [smem:[#allocation0]]
  $region18: #{tpu_custom_call.1} parent=0
    _
  %s5 = ssub.s32 1, %s3
  %s6 = scalar_select 0, %s5, %s3
  // Predicated region
  $region2: #{tpu_custom_call.1} parent=0 // pred_check
    _
  $region3: #{tpu_custom_call.1} parent=0 // pred_check_branch
    %8 = sbr.rel (0) target = $region5
  $region4: #{tpu_custom_call.1} parent=0 // pred_region
    _
  $region5: #{tpu_custom_call.1} parent=0 // pred_fallthru
    _
  // Predicated region
  $region6: #{tpu_custom_call.1} parent=0 // pred_check
    _
  $region7: #{tpu_custom_call.1} parent=0 // pred_check_branch
    %10 = sbr.rel (0) target = $region9
  $region8: #{tpu_custom_call.1} parent=0 // pred_region
    _
  $region9: #{tpu_custom_call.1} parent=0 // pred_fallthru
    _
  %v11 = vld [vmem:[%s0] sm:$0xff]
  %v12 = vld [vmem:[%s0 + $0x8] sm:$0xff]
  %v13 = vld [vmem:[%s0 + $0x10] sm:$0xff]
  %v14 = vld [vmem:[%s0 + $0x18] sm:$0xff]
  %v15 = vld [vmem:[%s0 + $0x20] sm:$0xff]
  %v16 = vld [vmem:[%s0 + $0x28] sm:$0xff]
  %v17 = vld [vmem:[%s0 + $0x30] sm:$0xff]
  %v18 = vld [vmem:[%s0 + $0x38] sm:$0xff]
  %v19 = vld [vmem:[%s0 + $0x40] sm:$0xff]
  %v20 = vld [vmem:[%s0 + $0x48] sm:$0xff]
  %v21 = vld [vmem:[%s0 + $0x50] sm:$0xff]
  %v22 = vld [vmem:[%s0 + $0x58] sm:$0xff]
  %v23 = vld [vmem:[%s0 + $0x60] sm:$0xff]
  %v24 = vld [vmem:[%s0 + $0x68] sm:$0xff]
  %v25 = vld [vmem:[%s0 + $0x70] sm:$0xff]
  %v26 = vld [vmem:[%s0 + $0x78] sm:$0xff]
  %v27 = vld [vmem:[%s1] sm:$0xff]
  %v28 = vld [vmem:[%s1 + $0x8] sm:$0xff]
  %v29 = vld [vmem:[%s1 + $0x10] sm:$0xff]
  %v30 = vld [vmem:[%s1 + $0x18] sm:$0xff]
  %v31 = vld [vmem:[%s1 + $0x20] sm:$0xff]
  %v32 = vld [vmem:[%s1 + $0x28] sm:$0xff]
  %v33 = vld [vmem:[%s1 + $0x30] sm:$0xff]
  %v34 = vld [vmem:[%s1 + $0x38] sm:$0xff]
  %v35 = vld [vmem:[%s1 + $0x40] sm:$0xff]
  %v36 = vld [vmem:[%s1 + $0x48] sm:$0xff]
  %v37 = vld [vmem:[%s1 + $0x50] sm:$0xff]
  %v38 = vld [vmem:[%s1 + $0x58] sm:$0xff]
  %v39 = vld [vmem:[%s1 + $0x60] sm:$0xff]
  %v40 = vld [vmem:[%s1 + $0x68] sm:$0xff]
  %v41 = vld [vmem:[%s1 + $0x70] sm:$0xff]
  %v42 = vld [vmem:[%s1 + $0x78] sm:$0xff]
  %vm43 = vcmask 130048
  %v44 = vsel %vm43, %v27, inf
  %45 = vmin.xlane.f32.xlu0 %v44
  %v46 = vpop.xlane.xlu0 %45
  %v47 = vsel %vm43, %v28, inf
  %48 = vmin.xlane.f32.xlu0 %v47
  %v49 = vpop.xlane.xlu0 %48
  %v50 = vsel %vm43, %v29, inf
  %51 = vmin.xlane.f32.xlu0 %v50
  %v52 = vpop.xlane.xlu0 %51
  %v53 = vsel %vm43, %v30, inf
  %54 = vmin.xlane.f32.xlu0 %v53
  %v55 = vpop.xlane.xlu0 %54
  %v56 = vsel %vm43, %v31, inf
  %57 = vmin.xlane.f32.xlu0 %v56
  %v58 = vpop.xlane.xlu0 %57
  %v59 = vsel %vm43, %v32, inf
  %60 = vmin.xlane.f32.xlu0 %v59
  %v61 = vpop.xlane.xlu0 %60
  %v62 = vsel %vm43, %v33, inf
  %63 = vmin.xlane.f32.xlu0 %v62
  %v64 = vpop.xlane.xlu0 %63
  %v65 = vsel %vm43, %v34, inf
  %66 = vmin.xlane.f32.xlu0 %v65
  %v67 = vpop.xlane.xlu0 %66
  %v68 = vsel %vm43, %v35, inf
  %69 = vmin.xlane.f32.xlu0 %v68
  %v70 = vpop.xlane.xlu0 %69
  %v71 = vsel %vm43, %v36, inf
  %72 = vmin.xlane.f32.xlu0 %v71
  %v73 = vpop.xlane.xlu0 %72
  %v74 = vsel %vm43, %v37, inf
  %75 = vmin.xlane.f32.xlu0 %v74
  %v76 = vpop.xlane.xlu0 %75
  %v77 = vsel %vm43, %v38, inf
  %78 = vmin.xlane.f32.xlu0 %v77
  %v79 = vpop.xlane.xlu0 %78
  %v80 = vsel %vm43, %v39, inf
  %81 = vmin.xlane.f32.xlu0 %v80
  %v82 = vpop.xlane.xlu0 %81
  %v83 = vsel %vm43, %v40, inf
  %84 = vmin.xlane.f32.xlu0 %v83
  %v85 = vpop.xlane.xlu0 %84
  %v86 = vsel %vm43, %v41, inf
  %87 = vmin.xlane.f32.xlu0 %v86
  %v88 = vpop.xlane.xlu0 %87
  %v89 = vsel %vm43, %v42, inf
  %90 = vmin.xlane.f32.xlu0 %v89
  %v91 = vpop.xlane.xlu0 %90
  %v92 = vsub.f32 %v27, %v46
  %v93 = vsub.f32 %v28, %v49
  %v94 = vsub.f32 %v29, %v52
  %v95 = vsub.f32 %v30, %v55
  %v96 = vsub.f32 %v31, %v58
  %v97 = vsub.f32 %v32, %v61
  %v98 = vsub.f32 %v33, %v64
  %v99 = vsub.f32 %v34, %v67
  %v100 = vsub.f32 %v35, %v70
  %v101 = vsub.f32 %v36, %v73
  %v102 = vsub.f32 %v37, %v76
  %v103 = vsub.f32 %v38, %v79
  %v104 = vsub.f32 %v39, %v82
  %v105 = vsub.f32 %v40, %v85
  %v106 = vsub.f32 %v41, %v88
  %v107 = vsub.f32 %v42, %v91
  %v108 = vadd.f32 %v92, 1.0
  %v109 = vadd.f32 %v93, 1.0
  %v110 = vadd.f32 %v94, 1.0
  %v111 = vadd.f32 %v95, 1.0
  %v112 = vadd.f32 %v96, 1.0
  %v113 = vadd.f32 %v97, 1.0
  %v114 = vadd.f32 %v98, 1.0
  %v115 = vadd.f32 %v99, 1.0
  %v116 = vadd.f32 %v100, 1.0
  %v117 = vadd.f32 %v101, 1.0
  %v118 = vadd.f32 %v102, 1.0
  %v119 = vadd.f32 %v103, 1.0
  %v120 = vadd.f32 %v104, 1.0
  %v121 = vadd.f32 %v105, 1.0
  %v122 = vadd.f32 %v106, 1.0
  %v123 = vadd.f32 %v107, 1.0
  %v124 = vlog2.pop %v108
  %v125 = vmul.f32 %v124, 0.6931472
  %v126 = vlog2.pop %v109
  %v127 = vmul.f32 %v126, 0.6931472
  %v128 = vlog2.pop %v110
  %v129 = vmul.f32 %v128, 0.6931472
  %v130 = vlog2.pop %v111
  %v131 = vmul.f32 %v130, 0.6931472
  %v132 = vlog2.pop %v112
  %v133 = vmul.f32 %v132, 0.6931472
  %v134 = vlog2.pop %v113
  %v135 = vmul.f32 %v134, 0.6931472
  %v136 = vlog2.pop %v114
  %v137 = vmul.f32 %v136, 0.6931472
  %v138 = vlog2.pop %v115
  %v139 = vmul.f32 %v138, 0.6931472
  %v140 = vlog2.pop %v116
  %v141 = vmul.f32 %v140, 0.6931472
  %v142 = vlog2.pop %v117
  %v143 = vmul.f32 %v142, 0.6931472
  %v144 = vlog2.pop %v118
  %v145 = vmul.f32 %v144, 0.6931472
  %v146 = vlog2.pop %v119
  %v147 = vmul.f32 %v146, 0.6931472
  %v148 = vlog2.pop %v120
  %v149 = vmul.f32 %v148, 0.6931472
  %v150 = vlog2.pop %v121
  %v151 = vmul.f32 %v150, 0.6931472
  %v152 = vlog2.pop %v122
  %v153 = vmul.f32 %v152, 0.6931472
  %v154 = vlog2.pop %v123
  %v155 = vmul.f32 %v154, 0.6931472
  %v156 = vsub.f32 %v11, %v125
  %v157 = vsub.f32 %v12, %v127
  %v158 = vsub.f32 %v13, %v129
  %v159 = vsub.f32 %v14, %v131
  %v160 = vsub.f32 %v15, %v133
  %v161 = vsub.f32 %v16, %v135
  %v162 = vsub.f32 %v17, %v137
  %v163 = vsub.f32 %v18, %v139
  %v164 = vsub.f32 %v19, %v141
  %v165 = vsub.f32 %v20, %v143
  %v166 = vsub.f32 %v21, %v145
  %v167 = vsub.f32 %v22, %v147
  %v168 = vsub.f32 %v23, %v149
  %v169 = vsub.f32 %v24, %v151
  %v170 = vsub.f32 %v25, %v153
  %v171 = vsub.f32 %v26, %v155
  %v172 = vmul.f32 %v156, %v156
  %v173 = vmul.f32 %v157, %v157
  %v174 = vmul.f32 %v158, %v158
  %v175 = vmul.f32 %v159, %v159
  %v176 = vmul.f32 %v160, %v160
  %v177 = vmul.f32 %v161, %v161
  %v178 = vmul.f32 %v162, %v162
  %v179 = vmul.f32 %v163, %v163
  %v180 = vmul.f32 %v164, %v164
  %v181 = vmul.f32 %v165, %v165
  %v182 = vmul.f32 %v166, %v166
  %v183 = vmul.f32 %v167, %v167
  %v184 = vmul.f32 %v168, %v168
  %v185 = vmul.f32 %v169, %v169
  %v186 = vmul.f32 %v170, %v170
  %v187 = vmul.f32 %v171, %v171
  %188 = vst.msk [vmem:[%s2] sm:$0xff] %vm43, %v172
  %189 = vst.msk [vmem:[%s2 + $0x8] sm:$0xff] %vm43, %v173
  %190 = vst.msk [vmem:[%s2 + $0x10] sm:$0xff] %vm43, %v174
  %191 = vst.msk [vmem:[%s2 + $0x18] sm:$0xff] %vm43, %v175
  %192 = vst.msk [vmem:[%s2 + $0x20] sm:$0xff] %vm43, %v176
  %193 = vst.msk [vmem:[%s2 + $0x28] sm:$0xff] %vm43, %v177
  %194 = vst.msk [vmem:[%s2 + $0x30] sm:$0xff] %vm43, %v178
  %195 = vst.msk [vmem:[%s2 + $0x38] sm:$0xff] %vm43, %v179
  %196 = vst.msk [vmem:[%s2 + $0x40] sm:$0xff] %vm43, %v180
  %197 = vst.msk [vmem:[%s2 + $0x48] sm:$0xff] %vm43, %v181
  %198 = vst.msk [vmem:[%s2 + $0x50] sm:$0xff] %vm43, %v182
  %199 = vst.msk [vmem:[%s2 + $0x58] sm:$0xff] %vm43, %v183
  %200 = vst.msk [vmem:[%s2 + $0x60] sm:$0xff] %vm43, %v184
  %201 = vst.msk [vmem:[%s2 + $0x68] sm:$0xff] %vm43, %v185
  %202 = vst.msk [vmem:[%s2 + $0x70] sm:$0xff] %vm43, %v186
  %203 = vst.msk [vmem:[%s2 + $0x78] sm:$0xff] %vm43, %v187
  // Predicated region
  $region10: #{tpu_custom_call.1} parent=0 // pred_check
    _
  $region11: #{tpu_custom_call.1} parent=0 // pred_check_branch
    %205 = sbr.rel (0) target = $region13
  $region12: #{tpu_custom_call.1} parent=0 // pred_region
    _
  $region13: #{tpu_custom_call.1} parent=0 // pred_fallthru
    _
  // Predicated region
  $region14: #{tpu_custom_call.1} parent=0 // pred_check
    _
  $region15: #{tpu_custom_call.1} parent=0 // pred_check_branch
    %207 = sbr.rel (0) target = $region17
  $region16: #{tpu_custom_call.1} parent=0 // pred_region
    _
  $region17: #{tpu_custom_call.1} parent=0 // pred_fallthru
    _

</llo_original>
